<compile_context>
chip_gen: v5e
topology: v5e:2x2
jax: 0.10.0
libtpu: 0.0.40
codegen_flags: <defaults>
</compile_context>

<pallas_src>
import functools

import jax
import jax.numpy as jnp
from jax import lax
from jax.experimental import pallas as pl
from jax.experimental.pallas import tpu as pltpu


# ----------------------------------------------------------------------------
# Fused Pallas kernel: the whole convolution stack for one batch element
# ----------------------------------------------------------------------------
def _stack_kernel(x_ref, cond_ref, w_in_ref, w_so_ref, y_ref, skips_ref,
                  *, K, dilations, C, S, T, use_out_flags):
    x_cur = x_ref[0]                 # (C, T) fp32 residual stream (stays resident)
    cond_slab = cond_ref[0]          # (Cc_aug, T): [cond rows | ones row | zero rows]
    t_idx = lax.broadcasted_iota(jnp.int32, (C, T), 1)   # lane index, hoisted

    for l, d in enumerate(dilations):                    # static, unrolled layer loop
        # ---- dilated causal conv + cond 1x1 + biases: ONE MXU matmul -------
        # tap k reads x[:, t - (K-1-k)*d] (zero for t-s < 0)
        taps = []
        for k in range(K):
            s = (K - 1 - k) * d
            if s == 0:
                taps.append(x_cur)
            elif s >= T:
                taps.append(jnp.zeros_like(x_cur))
            else:
                rolled = pltpu.roll(x_cur, shift=s, axis=1)      # XLU lane rotate
                taps.append(jnp.where(t_idx >= s, rolled, 0.0))  # causal mask
        op = jnp.concatenate(taps + [cond_slab], axis=0)         # (K*C + Cc_aug, T)
        h = jnp.dot(w_in_ref[l], op, preferred_element_type=jnp.float32)  # (2C, T)

        # ---- gated activation (EUP) ----------------------------------------
        z = jnp.tanh(h[:C]) * jax.nn.sigmoid(h[C:])

        # ---- skip 1x1 + out 1x1 + biases: ONE MXU matmul --------------------
        # reuse cond_slab's embedded ones row as the bias carrier
        z_aug = jnp.concatenate([z, cond_slab], axis=0)          # (C + Cc_aug, T)
        so = jnp.dot(w_so_ref[l], z_aug, preferred_element_type=jnp.float32)  # (S+C, T)

        skips_ref[0, l] = so[:S]
        out = so[S:] if use_out_flags[l] else z                  # last layer: identity
        x_cur = out + x_cur                                      # residual add

    y_ref[0] = x_cur


# ----------------------------------------------------------------------------
# One-time host-side weight packing (fold taps+cond+bias and skip+out+bias)
# ----------------------------------------------------------------------------
def pack_stack_params(layer_params, *, channels, cond_channels, kernel_size,
                      use_1x1_block_out=True):
    C, Cc, K = channels, cond_channels, kernel_size
    L = len(layer_params)
    S = layer_params[0]["w_skip"].shape[0]
    Cc_aug = ((Cc + 1 + 7) // 8) * 8          # cond rows + ones row, 8-aligned
    n_zero = Cc_aug - Cc - 1

    w_in, w_so, use_out_flags = [], [], []
    for i, p in enumerate(layer_params):
        use_out = bool(use_1x1_block_out) and (i != L - 1)
        use_out_flags.append(use_out)

        taps = [p["w_conv_k"][k] for k in range(K)]               # each (2C, C)
        b_in = (p["b_conv"] + p["b_cond"]).reshape(2 * C, 1)
        w_in.append(jnp.concatenate(
            taps + [p["w_cond"], b_in,
                    jnp.zeros((2 * C, n_zero), jnp.float32)], axis=1))

        wz = jnp.concatenate([p["w_skip"], p["w_out"]], axis=0)   # (S+C, C)
        bz = jnp.concatenate([p["b_skip"], p["b_out"]], axis=0).reshape(S + C, 1)
        w_so.append(jnp.concatenate(
            [wz, jnp.zeros((S + C, Cc), jnp.float32), bz,
             jnp.zeros((S + C, n_zero), jnp.float32)], axis=1))

    return {
        "w_in": jnp.stack(w_in),          # (L, 2C, K*C + Cc_aug)
        "w_so": jnp.stack(w_so),          # (L, S+C, C + Cc_aug)
        "use_out_flags": tuple(use_out_flags),
        "Cc_aug": Cc_aug,
        "S": S,
    }


# ----------------------------------------------------------------------------
# Stack forward (mirror of ConvolutionStack._forward_native)
# ----------------------------------------------------------------------------
def convolution_stack_forward(x, cond, packed, *, kernel_size, dilations):
    """x: (B, C, T), cond: (B, Cc, T).  Returns (output (B,C,T), list of skips)."""
    B, C, T = x.shape
    Cc = cond.shape[1]
    L = len(dilations)
    K = kernel_size
    S = packed["S"]
    Cc_aug = packed["Cc_aug"]
    w_in, w_so = packed["w_in"], packed["w_so"]
    W1, W2 = w_in.shape[-1], w_so.shape[-1]

    # conditioning slab with an embedded ones row (bias carrier), 8-aligned rows
    cond_aug = jnp.concatenate(
        [cond.astype(jnp.float32),
         jnp.ones((B, 1, T), jnp.float32),
         jnp.zeros((B, Cc_aug - Cc - 1, T), jnp.float32)], axis=1)

    kern = functools.partial(
        _stack_kernel, K=K, dilations=tuple(dilations), C=C, S=S, T=T,
        use_out_flags=packed["use_out_flags"])

    y, skips = pl.pallas_call(
        kern,
        out_shape=(jax.ShapeDtypeStruct((B, C, T), jnp.float32),
                   jax.ShapeDtypeStruct((B, L, S, T), jnp.float32)),
        grid=(B,),
        in_specs=[
            pl.BlockSpec((1, C, T), lambda b: (b, 0, 0)),          # x
            pl.BlockSpec((1, Cc_aug, T), lambda b: (b, 0, 0)),     # cond (+ones row)
            pl.BlockSpec((L, 2 * C, W1), lambda b: (0, 0, 0)),     # fused conv+cond W
            pl.BlockSpec((L, S + C, W2), lambda b: (0, 0, 0)),     # fused skip+out W
        ],
        out_specs=(pl.BlockSpec((1, C, T), lambda b: (b, 0, 0)),
                   pl.BlockSpec((1, L, S, T), lambda b: (b, 0, 0, 0))),
        compiler_params=pltpu.CompilerParams(
            dimension_semantics=("parallel",)),    # v7x: one batch per TensorCore
    )(x.astype(jnp.float32), cond_aug, w_in, w_so)

    # module semantics: skips is a list of per-layer (B, S, T) tensors
    return y, [skips[:, i] for i in range(L)]


# ----------------------------------------------------------------------------
# Pure-JAX reference (for numerical verification)
# ----------------------------------------------------------------------------
def _ref_layer(x, cond, p, kernel_size, dilation, use_out):
    C = x.shape[1]
    pad = (kernel_size - 1) * dilation
    w_conv = jnp.transpose(p["w_conv_k"], (1, 2, 0))        # (2C, C, K) OIH
    h = lax.conv_general_dilated(
        x, w_conv, window_strides=(1,), padding=[(pad, 0)],
        rhs_dilation=(dilation,), dimension_numbers=("NCH", "OIH", "NCH"))
    h = h + p["b_conv"][None]
    h = h + jnp.einsum("oc,bct->bot", p["w_cond"], cond) + p["b_cond"][None]
    z = jnp.tanh(h[:, :C]) * jax.nn.sigmoid(h[:, C:])
    s = jnp.einsum("oc,bct->bot", p["w_skip"], z) + p["b_skip"][None]
    if use_out:
        out = jnp.einsum("oc,bct->bot", p["w_out"], z) + p["b_out"][None]
    else:
        out = z
    return out + x, s


def _ref_stack(x, cond, layer_params, kernel_size, dilations):
    skips = []
    for i, (d, p) in enumerate(zip(dilations, layer_params)):
        use_out = i != len(dilations) - 1
        x, s = _ref_layer(x, cond, p, kernel_size, d, use_out)
        skips.append(s)
    return x, skips


# ----------------------------------------------------------------------------
# Deterministic parameter init (shapes follow the PyTorch module's __init__)
# ----------------------------------------------------------------------------
def init_stack_params(key, *, channels, skip_channels, cond_channels,
                      kernel_size, dilations):
    params = []
    for _ in dilations:
        key, *ks = jax.random.split(key, 9)
        p = {
            # conv.weight (2C, C, K) stored tap-major as (K, 2C, C) for packing
            "w_conv_k": 0.3 * jax.random.normal(
                ks[0], (kernel_size, 2 * channels, channels), jnp.float32),
            "b_conv": 0.1 * jax.random.normal(ks[1], (2 * channels, 1), jnp.float32),
            "w_cond": 0.3 * jax.random.normal(
                ks[2], (2 * channels, cond_channels), jnp.float32),
            "b_cond": 0.1 * jax.random.normal(ks[3], (2 * channels, 1), jnp.float32),
            "w_skip": 0.3 * jax.random.normal(
                ks[4], (skip_channels, channels), jnp.float32),
            "b_skip": 0.1 * jax.random.normal(ks[5], (skip_channels, 1), jnp.float32),
            "w_out": 0.3 * jax.random.normal(ks[6], (channels, channels), jnp.float32),
            "b_out": 0.1 * jax.random.normal(ks[7], (channels, 1), jnp.float32),
        }
        params.append(p)
    return params


if __name__ == "__main__":
    B, C, S_SKIP, C_COND, T = 2, 8, 16, 6, 128
    K = 3
    DILATIONS = [1, 2, 4]

    key = jax.random.PRNGKey(0)
    kx, kc, kp = jax.random.split(key, 3)
    x = jax.random.normal(kx, (B, C, T), jnp.float32)
    cond = jax.random.normal(kc, (B, C_COND, T), jnp.float32)
    layer_params = init_stack_params(
        kp, channels=C, skip_channels=S_SKIP, cond_channels=C_COND,
        kernel_size=K, dilations=DILATIONS)

    packed = pack_stack_params(
        layer_params, channels=C, cond_channels=C_COND, kernel_size=K,
        use_1x1_block_out=True)

    out, skips = convolution_stack_forward(
        x, cond, packed, kernel_size=K, dilations=DILATIONS)
    out = jax.block_until_ready(out)
    skips = [jax.block_until_ready(s) for s in skips]

    # verify against the pure-JAX reference
    ref_out, ref_skips = _ref_stack(x, cond, layer_params, K, DILATIONS)
    assert out.shape == (B, C, T)
    assert len(skips) == len(DILATIONS)
    assert all(s.shape == (B, S_SKIP, T) for s in skips)
    assert jnp.allclose(out, ref_out, atol=1e-3, rtol=1e-3)
    for s, rs in zip(skips, ref_skips):
        assert jnp.allclose(s, rs, atol=1e-3, rtol=1e-3)

    print("KERNEL_OK")
</pallas_src>

<mosaic_0001>
module attributes {stable_mosaic.version = 11 : i64} {
  func.func @_stack_kernel(%arg0: i32, %arg1: memref<1x8x128xf32, #tpu.memory_space<vmem>>, %arg2: memref<1x8x128xf32, #tpu.memory_space<vmem>>, %arg3: memref<3x16x32xf32, #tpu.memory_space<vmem>>, %arg4: memref<3x24x16xf32, #tpu.memory_space<vmem>>, %arg5: memref<1x8x128xf32, #tpu.memory_space<vmem>>, %arg6: memref<1x3x16x128xf32, #tpu.memory_space<vmem>>) attributes {dimension_semantics = [#tpu.dimension_semantics<parallel>], iteration_bounds = array<i64: 2>, scalar_prefetch = 0 : i64, scratch_operands = 0 : i64, tpu.core_type = #tpu.core_type<tc>, window_params = [{transform_indices = @transform_0, window_bounds = array<i64: 1, 8, 128>}, {transform_indices = @transform_1, window_bounds = array<i64: 1, 8, 128>}, {pipeline_mode = #tpu.pipeline_mode<synchronous>, transform_indices = @transform_2, window_bounds = array<i64: 3, 16, 32>}, {pipeline_mode = #tpu.pipeline_mode<synchronous>, transform_indices = @transform_3, window_bounds = array<i64: 3, 24, 16>}, {transform_indices = @transform_4, window_bounds = array<i64: 1, 8, 128>}, {transform_indices = @transform_5, window_bounds = array<i64: 1, 3, 16, 128>}]} {
    %c0 = arith.constant 0 : index
    %c0_0 = arith.constant 0 : index
    %c0_1 = arith.constant 0 : index
    %0 = vector.load %arg1[%c0, %c0_0, %c0_1] : memref<1x8x128xf32, #tpu.memory_space<vmem>>, vector<1x8x128xf32>
    %1 = vector.shape_cast %0 : vector<1x8x128xf32> to vector<8x128xf32>
    %c0_2 = arith.constant 0 : index
    %c0_3 = arith.constant 0 : index
    %c0_4 = arith.constant 0 : index
    %2 = vector.load %arg2[%c0_2, %c0_3, %c0_4] : memref<1x8x128xf32, #tpu.memory_space<vmem>>, vector<1x8x128xf32>
    %3 = vector.shape_cast %2 : vector<1x8x128xf32> to vector<8x128xf32>
    %4 = tpu.iota {dimensions = array<i32: 1>} : vector<8x128xi32>
    %c2_i32 = arith.constant 2 : i32
    %5 = tpu.dynamic_rotate %1 by %c2_i32 dim 1 : vector<8x128xf32>, i32 -> vector<8x128xf32>
    %c2_i32_5 = arith.constant 2 : i32
    %6 = vector.broadcast %c2_i32_5 : i32 to vector<8x128xi32>
    %7 = arith.cmpi sge, %4, %6 : vector<8x128xi32>
    %cst = arith.constant 0.000000e+00 : f32
    %8 = vector.broadcast %cst : f32 to vector<8x128xf32>
    %9 = arith.select %7, %5, %8 : vector<8x128xi1>, vector<8x128xf32>
    %c1_i32 = arith.constant 1 : i32
    %10 = tpu.dynamic_rotate %1 by %c1_i32 dim 1 : vector<8x128xf32>, i32 -> vector<8x128xf32>
    %c1_i32_6 = arith.constant 1 : i32
    %11 = vector.broadcast %c1_i32_6 : i32 to vector<8x128xi32>
    %12 = arith.cmpi sge, %4, %11 : vector<8x128xi32>
    %cst_7 = arith.constant 0.000000e+00 : f32
    %13 = vector.broadcast %cst_7 : f32 to vector<8x128xf32>
    %14 = arith.select %12, %10, %13 : vector<8x128xi1>, vector<8x128xf32>
    %15 = tpu.concatenate %9, %14, %1, %3 in 0 : vector<8x128xf32>, vector<8x128xf32>, vector<8x128xf32>, vector<8x128xf32> -> vector<32x128xf32>
    %c0_8 = arith.constant 0 : index
    %c0_9 = arith.constant 0 : index
    %c0_10 = arith.constant 0 : index
    %16 = vector.load %arg3[%c0_8, %c0_9, %c0_10] : memref<3x16x32xf32, #tpu.memory_space<vmem>>, vector<1x16x32xf32>
    %17 = vector.shape_cast %16 : vector<1x16x32xf32> to vector<16x32xf32>
    %cst_11 = arith.constant dense<0.000000e+00> : vector<16x128xf32>
    %18 = tpu.matmul %17, %15, %cst_11 {dimension_numbers = #tpu.dot_dimension_numbers<[1], [0], [0], [1], [0, 0, 1, 1], [], []>} : vector<16x32xf32>, vector<32x128xf32>, vector<16x128xf32> -> vector<16x128xf32>
    %19 = vector.extract_strided_slice %18 {offsets = [0, 0], sizes = [8, 128], strides = [1, 1]} : vector<16x128xf32> to vector<8x128xf32>
    %20 = math.tanh %19 : vector<8x128xf32>
    %21 = vector.extract_strided_slice %18 {offsets = [8, 0], sizes = [8, 128], strides = [1, 1]} : vector<16x128xf32> to vector<8x128xf32>
    %22 = arith.negf %21 : vector<8x128xf32>
    %23 = math.exp %22 : vector<8x128xf32>
    %cst_12 = arith.constant 1.000000e+00 : f32
    %24 = vector.broadcast %cst_12 : f32 to vector<8x128xf32>
    %25 = arith.addf %24, %23 : vector<8x128xf32>
    %26 = arith.divf %24, %25 : vector<8x128xf32>
    %27 = arith.mulf %20, %26 : vector<8x128xf32>
    %28 = tpu.concatenate %27, %3 in 0 : vector<8x128xf32>, vector<8x128xf32> -> vector<16x128xf32>
    %c0_13 = arith.constant 0 : index
    %c0_14 = arith.constant 0 : index
    %c0_15 = arith.constant 0 : index
    %29 = vector.load %arg4[%c0_13, %c0_14, %c0_15] : memref<3x24x16xf32, #tpu.memory_space<vmem>>, vector<1x24x16xf32>
    %30 = vector.shape_cast %29 : vector<1x24x16xf32> to vector<24x16xf32>
    %cst_16 = arith.constant dense<0.000000e+00> : vector<24x128xf32>
    %31 = tpu.matmul %30, %28, %cst_16 {dimension_numbers = #tpu.dot_dimension_numbers<[1], [0], [0], [1], [0, 0, 1, 1], [], []>} : vector<24x16xf32>, vector<16x128xf32>, vector<24x128xf32> -> vector<24x128xf32>
    %32 = vector.extract_strided_slice %31 {offsets = [0, 0], sizes = [16, 128], strides = [1, 1]} : vector<24x128xf32> to vector<16x128xf32>
    %c0_17 = arith.constant 0 : index
    %c0_18 = arith.constant 0 : index
    %c0_19 = arith.constant 0 : index
    %c0_20 = arith.constant 0 : index
    %33 = vector.load %arg6[%c0_17, %c0_18, %c0_19, %c0_20] : memref<1x3x16x128xf32, #tpu.memory_space<vmem>>, vector<1x1x16x128xf32>
    %34 = vector.shape_cast %33 : vector<1x1x16x128xf32> to vector<16x128xf32>
    %35 = vector.shape_cast %32 : vector<16x128xf32> to vector<1x1x16x128xf32>
    tpu.vector_store %arg6[%c0_17, %c0_18, %c0_19, %c0_20], %35 {strides = array<i32>} : memref<1x3x16x128xf32, #tpu.memory_space<vmem>>, vector<1x1x16x128xf32>,
    %36 = vector.extract_strided_slice %31 {offsets = [16, 0], sizes = [8, 128], strides = [1, 1]} : vector<24x128xf32> to vector<8x128xf32>
    %37 = arith.addf %36, %1 : vector<8x128xf32>
    %c4_i32 = arith.constant 4 : i32
    %38 = tpu.dynamic_rotate %37 by %c4_i32 dim 1 : vector<8x128xf32>, i32 -> vector<8x128xf32>
    %c4_i32_21 = arith.constant 4 : i32
    %39 = vector.broadcast %c4_i32_21 : i32 to vector<8x128xi32>
    %40 = arith.cmpi sge, %4, %39 : vector<8x128xi32>
    %cst_22 = arith.constant 0.000000e+00 : f32
    %41 = vector.broadcast %cst_22 : f32 to vector<8x128xf32>
    %42 = arith.select %40, %38, %41 : vector<8x128xi1>, vector<8x128xf32>
    %c2_i32_23 = arith.constant 2 : i32
    %43 = tpu.dynamic_rotate %37 by %c2_i32_23 dim 1 : vector<8x128xf32>, i32 -> vector<8x128xf32>
    %c2_i32_24 = arith.constant 2 : i32
    %44 = vector.broadcast %c2_i32_24 : i32 to vector<8x128xi32>
    %45 = arith.cmpi sge, %4, %44 : vector<8x128xi32>
    %cst_25 = arith.constant 0.000000e+00 : f32
    %46 = vector.broadcast %cst_25 : f32 to vector<8x128xf32>
    %47 = arith.select %45, %43, %46 : vector<8x128xi1>, vector<8x128xf32>
    %48 = tpu.concatenate %42, %47, %37, %3 in 0 : vector<8x128xf32>, vector<8x128xf32>, vector<8x128xf32>, vector<8x128xf32> -> vector<32x128xf32>
    %c1 = arith.constant 1 : index
    %c0_26 = arith.constant 0 : index
    %c0_27 = arith.constant 0 : index
    %49 = vector.load %arg3[%c1, %c0_26, %c0_27] : memref<3x16x32xf32, #tpu.memory_space<vmem>>, vector<1x16x32xf32>
    %50 = vector.shape_cast %49 : vector<1x16x32xf32> to vector<16x32xf32>
    %cst_28 = arith.constant dense<0.000000e+00> : vector<16x128xf32>
    %51 = tpu.matmul %50, %48, %cst_28 {dimension_numbers = #tpu.dot_dimension_numbers<[1], [0], [0], [1], [0, 0, 1, 1], [], []>} : vector<16x32xf32>, vector<32x128xf32>, vector<16x128xf32> -> vector<16x128xf32>
    %52 = vector.extract_strided_slice %51 {offsets = [0, 0], sizes = [8, 128], strides = [1, 1]} : vector<16x128xf32> to vector<8x128xf32>
    %53 = math.tanh %52 : vector<8x128xf32>
    %54 = vector.extract_strided_slice %51 {offsets = [8, 0], sizes = [8, 128], strides = [1, 1]} : vector<16x128xf32> to vector<8x128xf32>
    %55 = arith.negf %54 : vector<8x128xf32>
    %56 = math.exp %55 : vector<8x128xf32>
    %cst_29 = arith.constant 1.000000e+00 : f32
    %57 = vector.broadcast %cst_29 : f32 to vector<8x128xf32>
    %58 = arith.addf %57, %56 : vector<8x128xf32>
    %59 = arith.divf %57, %58 : vector<8x128xf32>
    %60 = arith.mulf %53, %59 : vector<8x128xf32>
    %61 = tpu.concatenate %60, %3 in 0 : vector<8x128xf32>, vector<8x128xf32> -> vector<16x128xf32>
    %c1_30 = arith.constant 1 : index
    %c0_31 = arith.constant 0 : index
    %c0_32 = arith.constant 0 : index
    %62 = vector.load %arg4[%c1_30, %c0_31, %c0_32] : memref<3x24x16xf32, #tpu.memory_space<vmem>>, vector<1x24x16xf32>
    %63 = vector.shape_cast %62 : vector<1x24x16xf32> to vector<24x16xf32>
    %cst_33 = arith.constant dense<0.000000e+00> : vector<24x128xf32>
    %64 = tpu.matmul %63, %61, %cst_33 {dimension_numbers = #tpu.dot_dimension_numbers<[1], [0], [0], [1], [0, 0, 1, 1], [], []>} : vector<24x16xf32>, vector<16x128xf32>, vector<24x128xf32> -> vector<24x128xf32>
    %65 = vector.extract_strided_slice %64 {offsets = [0, 0], sizes = [16, 128], strides = [1, 1]} : vector<24x128xf32> to vector<16x128xf32>
    %c0_34 = arith.constant 0 : index
    %c1_35 = arith.constant 1 : index
    %c0_36 = arith.constant 0 : index
    %c0_37 = arith.constant 0 : index
    %66 = vector.load %arg6[%c0_34, %c1_35, %c0_36, %c0_37] : memref<1x3x16x128xf32, #tpu.memory_space<vmem>>, vector<1x1x16x128xf32>
    %67 = vector.shape_cast %66 : vector<1x1x16x128xf32> to vector<16x128xf32>
    %68 = vector.shape_cast %65 : vector<16x128xf32> to vector<1x1x16x128xf32>
    tpu.vector_store %arg6[%c0_34, %c1_35, %c0_36, %c0_37], %68 {strides = array<i32>} : memref<1x3x16x128xf32, #tpu.memory_space<vmem>>, vector<1x1x16x128xf32>,
    %69 = vector.extract_strided_slice %64 {offsets = [16, 0], sizes = [8, 128], strides = [1, 1]} : vector<24x128xf32> to vector<8x128xf32>
    %70 = arith.addf %69, %37 : vector<8x128xf32>
    %c8_i32 = arith.constant 8 : i32
    %71 = tpu.dynamic_rotate %70 by %c8_i32 dim 1 : vector<8x128xf32>, i32 -> vector<8x128xf32>
    %c8_i32_38 = arith.constant 8 : i32
    %72 = vector.broadcast %c8_i32_38 : i32 to vector<8x128xi32>
    %73 = arith.cmpi sge, %4, %72 : vector<8x128xi32>
    %cst_39 = arith.constant 0.000000e+00 : f32
    %74 = vector.broadcast %cst_39 : f32 to vector<8x128xf32>
    %75 = arith.select %73, %71, %74 : vector<8x128xi1>, vector<8x128xf32>
    %c4_i32_40 = arith.constant 4 : i32
    %76 = tpu.dynamic_rotate %70 by %c4_i32_40 dim 1 : vector<8x128xf32>, i32 -> vector<8x128xf32>
    %c4_i32_41 = arith.constant 4 : i32
    %77 = vector.broadcast %c4_i32_41 : i32 to vector<8x128xi32>
    %78 = arith.cmpi sge, %4, %77 : vector<8x128xi32>
    %cst_42 = arith.constant 0.000000e+00 : f32
    %79 = vector.broadcast %cst_42 : f32 to vector<8x128xf32>
    %80 = arith.select %78, %76, %79 : vector<8x128xi1>, vector<8x128xf32>
    %81 = tpu.concatenate %75, %80, %70, %3 in 0 : vector<8x128xf32>, vector<8x128xf32>, vector<8x128xf32>, vector<8x128xf32> -> vector<32x128xf32>
    %c2 = arith.constant 2 : index
    %c0_43 = arith.constant 0 : index
    %c0_44 = arith.constant 0 : index
    %82 = vector.load %arg3[%c2, %c0_43, %c0_44] : memref<3x16x32xf32, #tpu.memory_space<vmem>>, vector<1x16x32xf32>
    %83 = vector.shape_cast %82 : vector<1x16x32xf32> to vector<16x32xf32>
    %cst_45 = arith.constant dense<0.000000e+00> : vector<16x128xf32>
    %84 = tpu.matmul %83, %81, %cst_45 {dimension_numbers = #tpu.dot_dimension_numbers<[1], [0], [0], [1], [0, 0, 1, 1], [], []>} : vector<16x32xf32>, vector<32x128xf32>, vector<16x128xf32> -> vector<16x128xf32>
    %85 = vector.extract_strided_slice %84 {offsets = [0, 0], sizes = [8, 128], strides = [1, 1]} : vector<16x128xf32> to vector<8x128xf32>
    %86 = math.tanh %85 : vector<8x128xf32>
    %87 = vector.extract_strided_slice %84 {offsets = [8, 0], sizes = [8, 128], strides = [1, 1]} : vector<16x128xf32> to vector<8x128xf32>
    %88 = arith.negf %87 : vector<8x128xf32>
    %89 = math.exp %88 : vector<8x128xf32>
    %cst_46 = arith.constant 1.000000e+00 : f32
    %90 = vector.broadcast %cst_46 : f32 to vector<8x128xf32>
    %91 = arith.addf %90, %89 : vector<8x128xf32>
    %92 = arith.divf %90, %91 : vector<8x128xf32>
    %93 = arith.mulf %86, %92 : vector<8x128xf32>
    %94 = tpu.concatenate %93, %3 in 0 : vector<8x128xf32>, vector<8x128xf32> -> vector<16x128xf32>
    %c2_47 = arith.constant 2 : index
    %c0_48 = arith.constant 0 : index
    %c0_49 = arith.constant 0 : index
    %95 = vector.load %arg4[%c2_47, %c0_48, %c0_49] : memref<3x24x16xf32, #tpu.memory_space<vmem>>, vector<1x24x16xf32>
    %96 = vector.shape_cast %95 : vector<1x24x16xf32> to vector<24x16xf32>
    %cst_50 = arith.constant dense<0.000000e+00> : vector<24x128xf32>
    %97 = tpu.matmul %96, %94, %cst_50 {dimension_numbers = #tpu.dot_dimension_numbers<[1], [0], [0], [1], [0, 0, 1, 1], [], []>} : vector<24x16xf32>, vector<16x128xf32>, vector<24x128xf32> -> vector<24x128xf32>
    %98 = vector.extract_strided_slice %97 {offsets = [0, 0], sizes = [16, 128], strides = [1, 1]} : vector<24x128xf32> to vector<16x128xf32>
    %c0_51 = arith.constant 0 : index
    %c2_52 = arith.constant 2 : index
    %c0_53 = arith.constant 0 : index
    %c0_54 = arith.constant 0 : index
    %99 = vector.load %arg6[%c0_51, %c2_52, %c0_53, %c0_54] : memref<1x3x16x128xf32, #tpu.memory_space<vmem>>, vector<1x1x16x128xf32>
    %100 = vector.shape_cast %99 : vector<1x1x16x128xf32> to vector<16x128xf32>
    %101 = vector.shape_cast %98 : vector<16x128xf32> to vector<1x1x16x128xf32>
    tpu.vector_store %arg6[%c0_51, %c2_52, %c0_53, %c0_54], %101 {strides = array<i32>} : memref<1x3x16x128xf32, #tpu.memory_space<vmem>>, vector<1x1x16x128xf32>,
    %102 = arith.addf %93, %70 : vector<8x128xf32>
    %c0_55 = arith.constant 0 : index
    %c0_56 = arith.constant 0 : index
    %c0_57 = arith.constant 0 : index
    %103 = vector.load %arg5[%c0_55, %c0_56, %c0_57] : memref<1x8x128xf32, #tpu.memory_space<vmem>>, vector<1x8x128xf32>
    %104 = vector.shape_cast %103 : vector<1x8x128xf32> to vector<8x128xf32>
    %105 = vector.shape_cast %102 : vector<8x128xf32> to vector<1x8x128xf32>
    tpu.vector_store %arg5[%c0_55, %c0_56, %c0_57], %105 {strides = array<i32>} : memref<1x8x128xf32, #tpu.memory_space<vmem>>, vector<1x8x128xf32>,
    return
  }
  func.func @transform_0(%arg0: i32) -> (i32, i32, i32) {
    %c0_i32 = arith.constant 0 : i32
    %c0_i32_0 = arith.constant 0 : i32
    %c0_i32_1 = arith.constant 0 : i32
    return %arg0, %c0_i32, %c0_i32_0 : i32, i32, i32
  }
  func.func @transform_1(%arg0: i32) -> (i32, i32, i32) {
    %c0_i32 = arith.constant 0 : i32
    %c0_i32_0 = arith.constant 0 : i32
    %c0_i32_1 = arith.constant 0 : i32
    return %arg0, %c0_i32, %c0_i32_0 : i32, i32, i32
  }
  func.func @transform_2(%arg0: i32) -> (i32, i32, i32) {
    %c0_i32 = arith.constant 0 : i32
    %c0_i32_0 = arith.constant 0 : i32
    %c0_i32_1 = arith.constant 0 : i32
    %c0_i32_2 = arith.constant 0 : i32
    return %c0_i32, %c0_i32_0, %c0_i32_1 : i32, i32, i32
  }
  func.func @transform_3(%arg0: i32) -> (i32, i32, i32) {
    %c0_i32 = arith.constant 0 : i32
    %c0_i32_0 = arith.constant 0 : i32
    %c0_i32_1 = arith.constant 0 : i32
    %c0_i32_2 = arith.constant 0 : i32
    return %c0_i32, %c0_i32_0, %c0_i32_1 : i32, i32, i32
  }
  func.func @transform_4(%arg0: i32) -> (i32, i32, i32) {
    %c0_i32 = arith.constant 0 : i32
    %c0_i32_0 = arith.constant 0 : i32
    %c0_i32_1 = arith.constant 0 : i32
    return %arg0, %c0_i32, %c0_i32_0 : i32, i32, i32
  }
  func.func @transform_5(%arg0: i32) -> (i32, i32, i32, i32) {
    %c0_i32 = arith.constant 0 : i32
    %c0_i32_0 = arith.constant 0 : i32
    %c0_i32_1 = arith.constant 0 : i32
    %c0_i32_2 = arith.constant 0 : i32
    return %arg0, %c0_i32, %c0_i32_0, %c0_i32_1 : i32, i32, i32, i32
  }
}

</mosaic_0001>

<llo_original>
// kernel: tpu_custom_call.1
$region0: #{tpu_custom_call.1}
  #allocation0 [shape = 'u32[]', space=smem, size = 0x4, offset = 0x4, fixed_abs, tag = 'smem constant byte address 0x4 - core index']
  #allocation1 [shape = 'u32[72,128]{1,0:T(1,128)}', space=vmem, size = 0x9000, scoped, tag = 'internal scratch']
  %s0 = inlined_call_operand.vmem [shape: f32[2,8,128], index: 0, kind: input, shape index: {}]
  %s1 = inlined_call_operand.vmem [shape: f32[2,8,128], index: 1, kind: input, shape index: {}]
  %s2 = inlined_call_operand.vmem [shape: f32[3,16,32], index: 2, kind: input, shape index: {}]
  %s3 = inlined_call_operand.vmem [shape: f32[3,24,16], index: 3, kind: input, shape index: {}]
  %s4 = inlined_call_operand.hbm [shape: f32[2,8,128], index: 4, kind: output, shape index: {0}]
  %s5 = inlined_call_operand.hbm [shape: f32[2,3,16,128], index: 5, kind: output, shape index: {1}]
  %6 = xla_tuple %s4, %s5
  %s7 = sld [smem:[#allocation0]]
  $region57: #{tpu_custom_call.1} parent=0
    _
  %s9 = ssub.s32 1, %s7
  %s10 = scalar_select 0, %s9, %s7
  $region1: #{tpu_custom_call.1} parent=0
    #allocation2 [shape = 'u8[8192]{0}', space=vmem, size = 0x2000, scoped, tag = 'output window, operand 0']
    #allocation3 [shape = 's32[2]{0}', space=sflag, size = 0x8, scoped, tag = 'scoped memory for tpu_custom_call.1']
    #allocation4 [shape = 'u8[49152]{0}', space=vmem, size = 0xc000, scoped, tag = 'output window, operand 1']
    #allocation5 [shape = 's32[2]{0}', space=sflag, size = 0x8, scoped, tag = 'scoped memory for tpu_custom_call.1']
    %11 = vsyncpa [#allocation3], 0
    %s12 = scalar_lea.sflag [#allocation3], 1
    %13 = vsyncpa %s12, 0
    %14 = vsyncpa [#allocation5], 0
    %s15 = scalar_lea.sflag [#allocation5], 1
    %16 = vsyncpa %s15, 0
    loop: start=0, step=1, limit=4
    $region2: #{tpu_custom_call.1} parent=1 // loop_pre_header
      _
    $region3: #{tpu_custom_call.1} parent=1 // loop_header
      %s18 = sphi 0, %s22
      %p19 = scmp.ge.s32.totalorder %s18, 4
      %s28 = sphi 0, %s30
      %s31 = sphi 0, %s28
      %s32 = sphi 0, %s31
      %s48 = sphi 0, %s32
      %s54 = sphi 0, %s56
      %s57 = sphi 0, %s54
      %s58 = sphi 0, %s57
      %s74 = sphi 0, %s58
      %s78 = sphi 0, %s78
      %s80 = sphi 0, %s78
      %s81 = sphi 0, %s80
      %s95 = sphi 0, %s81
      %s99 = sphi 0, %s99
      %s101 = sphi 0, %s99
      %s102 = sphi 0, %s101
      %s116 = sphi 0, %s102
      %s122 = sphi 0, %s124
      %s125 = sphi 0, %s122
      %s126 = sphi 0, %s125
      %s142 = sphi 0, %s126
      %s148 = sphi 0, %s150
      %s151 = sphi 0, %s148
      %s152 = sphi 0, %s151
      %s168 = sphi 0, %s152
    $region4: #{tpu_custom_call.1} parent=1 // loop_header_branch
      %21 = sbr.rel (%p19) target = $region8
    $region5: #{tpu_custom_call.1} parent=1 // loop_body
      %s23 = ssub.s32 %s18, 1
      %s24 = ssub.s32 %s18, 2
      %s25 = sadd.s32 %s18, 1
      %s26 = ssub.s32 %s18, %s25
      %p27 = scmp.eq.s32.totalorder %s26, 0
      %s29 = sadd.s32 %s28, 1
      %s30 = scalar_select %p27, %s28, %s29
      %p33 = pneg %p27
      %p34 = scmp.eq.s32.totalorder %s18, 1
      %p35 = por %p33, %p34
      %p36 = scmp.ne.s32.totalorder %s28, %s31
      %p37 = scmp.eq.s32.totalorder %s18, 0
      %p38 = por %p36, %p37
      %p39 = scmp.ne.s32.totalorder %s28, %s31
      %p40 = scmp.eq.s32.totalorder %s23, 1
      %p41 = por %p39, %p40
      %p42 = scmp.ne.s32.totalorder %s31, %s32
      %p43 = scmp.eq.s32.totalorder %s23, 0
      %p44 = por %p42, %p43
      %p45 = scmp.ne.s32.totalorder %s31, %s32
      %p46 = scmp.eq.s32.totalorder %s24, 1
      %p47 = por %p45, %p46
      %p49 = scmp.ne.s32.totalorder %s32, %s48
      %p50 = scmp.eq.s32.totalorder %s24, 0
      %p51 = por %p49, %p50
      %s52 = ssub.s32 %s18, %s25
      %p53 = scmp.eq.s32.totalorder %s52, 0
      %s55 = sadd.s32 %s54, 1
      %s56 = scalar_select %p53, %s54, %s55
      %p59 = pneg %p53
      %p60 = scmp.eq.s32.totalorder %s18, 1
      %p61 = por %p59, %p60
      %p62 = scmp.ne.s32.totalorder %s54, %s57
      %p63 = scmp.eq.s32.totalorder %s18, 0
      %p64 = por %p62, %p63
      %p65 = scmp.ne.s32.totalorder %s54, %s57
      %p66 = scmp.eq.s32.totalorder %s23, 1
      %p67 = por %p65, %p66
      %p68 = scmp.ne.s32.totalorder %s57, %s58
      %p69 = scmp.eq.s32.totalorder %s23, 0
      %p70 = por %p68, %p69
      %p71 = scmp.ne.s32.totalorder %s57, %s58
      %p72 = scmp.eq.s32.totalorder %s24, 1
      %p73 = por %p71, %p72
      %p75 = scmp.ne.s32.totalorder %s58, %s74
      %p76 = scmp.eq.s32.totalorder %s24, 0
      %p77 = por %p75, %p76
      %s79 = sadd.s32 %s78, 1
      %p82 = scmp.eq.s32.totalorder %s18, 1
      %p83 = scmp.ne.s32.totalorder %s78, %s80
      %p84 = scmp.eq.s32.totalorder %s18, 0
      %p85 = por %p83, %p84
      %p86 = scmp.ne.s32.totalorder %s78, %s80
      %p87 = scmp.eq.s32.totalorder %s23, 1
      %p88 = por %p86, %p87
      %p89 = scmp.ne.s32.totalorder %s80, %s81
      %p90 = scmp.eq.s32.totalorder %s23, 0
      %p91 = por %p89, %p90
      %p92 = scmp.ne.s32.totalorder %s80, %s81
      %p93 = scmp.eq.s32.totalorder %s24, 1
      %p94 = por %p92, %p93
      %p96 = scmp.ne.s32.totalorder %s81, %s95
      %p97 = scmp.eq.s32.totalorder %s24, 0
      %p98 = por %p96, %p97
      %s100 = sadd.s32 %s99, 1
      %p103 = scmp.eq.s32.totalorder %s18, 1
      %p104 = scmp.ne.s32.totalorder %s99, %s101
      %p105 = scmp.eq.s32.totalorder %s18, 0
      %p106 = por %p104, %p105
      %p107 = scmp.ne.s32.totalorder %s99, %s101
      %p108 = scmp.eq.s32.totalorder %s23, 1
      %p109 = por %p107, %p108
      %p110 = scmp.ne.s32.totalorder %s101, %s102
      %p111 = scmp.eq.s32.totalorder %s23, 0
      %p112 = por %p110, %p111
      %p113 = scmp.ne.s32.totalorder %s101, %s102
      %p114 = scmp.eq.s32.totalorder %s24, 1
      %p115 = por %p113, %p114
      %p117 = scmp.ne.s32.totalorder %s102, %s116
      %p118 = scmp.eq.s32.totalorder %s24, 0
      %p119 = por %p117, %p118
      %s120 = ssub.s32 %s18, %s25
      %p121 = scmp.eq.s32.totalorder %s120, 0
      %s123 = sadd.s32 %s122, 1
      %s124 = scalar_select %p121, %s122, %s123
      %p127 = pneg %p121
      %p128 = scmp.eq.s32.totalorder %s18, 1
      %p129 = por %p127, %p128
      %p130 = scmp.ne.s32.totalorder %s122, %s125
      %p131 = scmp.eq.s32.totalorder %s18, 0
      %p132 = por %p130, %p131
      %p133 = scmp.ne.s32.totalorder %s122, %s125
      %p134 = scmp.eq.s32.totalorder %s23, 1
      %p135 = por %p133, %p134
      %p136 = scmp.ne.s32.totalorder %s125, %s126
      %p137 = scmp.eq.s32.totalorder %s23, 0
      %p138 = por %p136, %p137
      %p139 = scmp.ne.s32.totalorder %s125, %s126
      %p140 = scmp.eq.s32.totalorder %s24, 1
      %p141 = por %p139, %p140
      %p143 = scmp.ne.s32.totalorder %s126, %s142
      %p144 = scmp.eq.s32.totalorder %s24, 0
      %p145 = por %p143, %p144
      %s146 = ssub.s32 %s18, %s25
      %p147 = scmp.eq.s32.totalorder %s146, 0
      %s149 = sadd.s32 %s148, 1
      %s150 = scalar_select %p147, %s148, %s149
      %p153 = pneg %p147
      %p154 = scmp.eq.s32.totalorder %s18, 1
      %p155 = por %p153, %p154
      %p156 = scmp.ne.s32.totalorder %s148, %s151
      %p157 = scmp.eq.s32.totalorder %s18, 0
      %p158 = por %p156, %p157
      %p159 = scmp.ne.s32.totalorder %s148, %s151
      %p160 = scmp.eq.s32.totalorder %s23, 1
      %p161 = por %p159, %p160
      %p162 = scmp.ne.s32.totalorder %s151, %s152
      %p163 = scmp.eq.s32.totalorder %s23, 0
      %p164 = por %p162, %p163
      %p165 = scmp.ne.s32.totalorder %s151, %s152
      %p166 = scmp.eq.s32.totalorder %s24, 1
      %p167 = por %p165, %p166
      %p169 = scmp.ne.s32.totalorder %s152, %s168
      %p170 = scmp.eq.s32.totalorder %s24, 0
      %p171 = por %p169, %p170
      %p172 = scmp.le.s32.totalorder 1, %s18
      %p173 = scmp.lt.s32.totalorder %s18, 3
      %p174 = pnand %p172, %p173
      %p175 = pneg %p174
      // Predicated region
      $region9: #{tpu_custom_call.1} parent=5 // pred_check
        _
      $region10: #{tpu_custom_call.1} parent=5 // pred_check_branch
        %177 = sbr.rel (%p174) target = $region12
      $region11: #{tpu_custom_call.1} parent=5 // pred_region
        %s178 = ssub.s32 %s18, 1
        // Predicated region
        $region13: #{tpu_custom_call.1} parent=11 // pred_check
          %p179 = pneg %p91
        $region14: #{tpu_custom_call.1} parent=11 // pred_check_branch
          %181 = sbr.rel (%p179) target = $region16
        $region15: #{tpu_custom_call.1} parent=11 // pred_region
          _
        $region16: #{tpu_custom_call.1} parent=11 // pred_fallthru
          _
        // Predicated region
        $region17: #{tpu_custom_call.1} parent=11 // pred_check
          %p182 = pneg %p112
        $region18: #{tpu_custom_call.1} parent=11 // pred_check_branch
          %184 = sbr.rel (%p182) target = $region20
        $region19: #{tpu_custom_call.1} parent=11 // pred_region
          _
        $region20: #{tpu_custom_call.1} parent=11 // pred_fallthru
          _
      $region12: #{tpu_custom_call.1} parent=5 // pred_fallthru
        _
      %p185 = scmp.lt.s32.totalorder %s18, 2
      // Predicated region
      $region21: #{tpu_custom_call.1} parent=5 // pred_check
        %p186 = pneg %p185
      $region22: #{tpu_custom_call.1} parent=5 // pred_check_branch
        %188 = sbr.rel (%p186) target = $region24
      $region23: #{tpu_custom_call.1} parent=5 // pred_region
        // Predicated region
        $region25: #{tpu_custom_call.1} parent=23 // pred_check
          %p189 = pneg %p38
        $region26: #{tpu_custom_call.1} parent=23 // pred_check_branch
          %191 = sbr.rel (%p189) target = $region28
        $region27: #{tpu_custom_call.1} parent=23 // pred_region
          %p192 = scmp.lt.s32.totalorder %s18, 1
          %s193 = scalar_select %p192, %s18, 1
          %s194 = smul.addr %s193, 8
          %s195 = scalar_lea.vmem %s0, %s194
        $region28: #{tpu_custom_call.1} parent=23 // pred_fallthru
          _
        // Predicated region
        $region29: #{tpu_custom_call.1} parent=23 // pred_check
          %p196 = pneg %p64
        $region30: #{tpu_custom_call.1} parent=23 // pred_check_branch
          %198 = sbr.rel (%p196) target = $region32
        $region31: #{tpu_custom_call.1} parent=23 // pred_region
          %p199 = scmp.lt.s32.totalorder %s18, 1
          %s200 = scalar_select %p199, %s18, 1
          %s201 = smul.addr %s200, 8
          %s202 = scalar_lea.vmem %s1, %s201
        $region32: #{tpu_custom_call.1} parent=23 // pred_fallthru
          _
      $region24: #{tpu_custom_call.1} parent=5 // pred_fallthru
        _
      %p203 = scmp.le.s32.totalorder 1, %s18
      %p204 = scmp.lt.s32.totalorder %s18, 3
      %p205 = pnand %p203, %p204
      %p206 = pneg %p205
      // Predicated region
      $region33: #{tpu_custom_call.1} parent=5 // pred_check
        _
      $region34: #{tpu_custom_call.1} parent=5 // pred_check_branch
        %208 = sbr.rel (%p205) target = $region36
      $region35: #{tpu_custom_call.1} parent=5 // pred_region
        %s209 = ssub.s32 %s18, 1
        %p210 = scmp.lt.s32.totalorder %s23, 1
        %s211 = scalar_select %p210, %s23, 1
        %s212 = smul.addr %s211, 8
        %s213 = scalar_lea.vmem %s0, %s212
        %p214 = pneg %p44
        %p215 = pneg %p41
        %p216 = scmp.lt.s32.totalorder %s23, 1
        %s217 = scalar_select %p216, %s23, 1
        %s218 = smul.addr %s217, 8
        %s219 = scalar_lea.vmem %s1, %s218
        %p220 = pneg %p70
        %p221 = pneg %p67
        %p222 = pneg %p91
        %p223 = pneg %p88
        %p224 = pneg %p112
        %p225 = pneg %p109
        %p226 = pneg %p138
        %p227 = pneg %p135
        %s228 = sand.u32 %s125, 1
        %s229 = scalar_lea.sflag [#allocation3], %s228
        %s230 = sand.u32 %s125, 1
        %s231 = smul.addr %s230, 8
        %s232 = scalar_lea.vmem [#allocation2], %s231
        %p233 = pneg %p164
        %p234 = pneg %p161
        %s235 = sand.u32 %s151, 1
        %s236 = scalar_lea.sflag [#allocation5], %s235
        %s237 = sand.u32 %s151, 1
        %s238 = smul.addr %s237, 48
        %s239 = scalar_lea.vmem [#allocation4], %s238
        %p240 = scmp.lt.s32.totalorder %s23, 1
        %s241 = scalar_select %p240, %s23, 1
        %s242 = smul.addr %s241, 8
        %s243 = scalar_lea.vmem %s0, %s242
        %p244 = scmp.lt.s32.totalorder %s23, 1
        %s245 = scalar_select %p244, %s23, 1
        %s246 = smul.addr %s245, 8
        %s247 = scalar_lea.vmem %s1, %s246
        %v248 = vld [vmem:[%s243] sm:$0xff]
        %v249 = vld [vmem:[%s247] sm:$0xff]
        %v250 = vlaneseq
        %v251 = vand.u32 %v250, 127
        %252 = vrot.lane.b32.xlu0 %v248, 2
        %v253 = vpop.permute.xlu0 %252
        %vm254 = vcmp.ge.s32.totalorder %v251, 2
        %v255 = vsel %vm254, %v253, 0.0
        %256 = vrot.lane.b32.xlu0 %v248, 1
        %v257 = vpop.permute.xlu0 %256
        %vm258 = vcmp.ge.s32.totalorder %v251, 1
        %v259 = vsel %vm258, %v257, 0.0
        %v260 = vld [vmem:[%s2] sm:$0xff]
        %v261 = vld [vmem:[%s2 + $0x8] sm:$0xff]
        %vm262 = vcmask 261120
        %v264 = vsel %vm262, %v260, 0
        %v267 = vsel %vm262, %v261, 0
        %269 = vmatpush.msra.mxu0 0.0
        %270 = vmatpush.msra.mxu0 0.0
        %271 = vmatpush.msra.mxu0 0.0
        %272 = vmatpush.msra.mxu0 0.0
        %273 = vmatpush.msra.mxu0 0.0
        %274 = vmatpush.msra.mxu0 0.0
        %275 = vmatpush.msra.mxu0 0.0
        %276 = vmatpush.msra.mxu0 0.0
        %277 = vmatpush.msra.mxu0 0.0
        %278 = vmatpush.msra.mxu0 0.0
        %279 = vmatpush.msra.mxu0 0.0
        %280 = vmatpush.msra.mxu0 0.0
        %281 = vmatpush.msra.mxu0 %v249
        %282 = vmatpush.msra.mxu0 %v248
        %283 = vmatpush.msra.mxu0 %v259
        %284 = vmatpush.msra.mxu0 %v255
        %285 = vmatmul.f32.gmra.mxu0 %v264
        %v286 = vpop.f32.mrf.mxu0
        %v287 = vadd.f32 0.0, %v286
        %288 = vmatmul.f32.gmra.mxu0 %v267
        %v289 = vpop.f32.mrf.mxu0
        %v290 = vadd.f32 0.0, %v289
        %291 = vdwg.mxu0
        %v292 = vtanh.pop %v287
        %v293 = vxor.u32 %v290, 2147483648
        %v294 = vmul.f32 %v293, 1.442695
        %v295 = vpow.pop %v294
        %v296 = vadd.f32 %v295, 1.0
        %v297 = vrcp.pop %v296
        %v298 = vmul.f32 %v296, %v297
        %v299 = vsub.f32 1.0, %v298
        %v300 = vmul.f32 %v297, %v299
        %v301 = vadd.f32 %v297, %v300
        %vm302 = vweird.f32 %v296
        %vm303 = vweird.f32 %v297
        %vm304 = vmor %vm302, %vm303
        %v305 = vsel %vm304, %v297, %v301
        %v306 = vand.u32 2147483647, %v296
        %vm307 = vcmp.eq.f32.partialorder %v306, 8.507059e+37
        %v308 = vand.u32 %v296, 2147483648
        %v309 = vor.u32 1.1754944e-38, %v308
        %v310 = vsel %vm307, %v309, %v305
        %v311 = vmul.f32 1.0, %v310
        %v312 = vmul.f32 %v292, %v311
        %v313 = vld [vmem:[%s3] sm:$0xff]
        %v314 = vld [vmem:[%s3 + $0x8] sm:$0xff]
        %v315 = vld [vmem:[%s3 + $0x10] sm:$0xff]
        %vm316 = vcmask 130048
        %v318 = vsel %vm316, %v313, 0
        %v321 = vsel %vm316, %v314, 0
        %v324 = vsel %vm316, %v315, 0
        %326 = vmatpush.msra.mxu0 0.0
        %327 = vmatpush.msra.mxu0 0.0
        %328 = vmatpush.msra.mxu0 0.0
        %329 = vmatpush.msra.mxu0 0.0
        %330 = vmatpush.msra.mxu0 0.0
        %331 = vmatpush.msra.mxu0 0.0
        %332 = vmatpush.msra.mxu0 0.0
        %333 = vmatpush.msra.mxu0 0.0
        %334 = vmatpush.msra.mxu0 0.0
        %335 = vmatpush.msra.mxu0 0.0
        %336 = vmatpush.msra.mxu0 0.0
        %337 = vmatpush.msra.mxu0 0.0
        %338 = vmatpush.msra.mxu0 0.0
        %339 = vmatpush.msra.mxu0 0.0
        %340 = vmatpush.msra.mxu0 %v249
        %341 = vmatpush.msra.mxu0 %v312
        %342 = vmatmul.f32.gmra.mxu0 %v318
        %v343 = vpop.f32.mrf.mxu0
        %v344 = vadd.f32 0.0, %v343
        %345 = vmatmul.f32.gmra.mxu0 %v321
        %v346 = vpop.f32.mrf.mxu0
        %v347 = vadd.f32 0.0, %v346
        %348 = vmatmul.f32.gmra.mxu0 %v324
        %v349 = vpop.f32.mrf.mxu0
        %v350 = vadd.f32 0.0, %v349
        %351 = vdwg.mxu0
        %352 = vst [vmem:[%s239] sm:$0xff] %v344
        %353 = vst [vmem:[%s239 + $0x8] sm:$0xff] %v347
        %v354 = vadd.f32 %v350, %v248
        %355 = vrot.lane.b32.xlu0 %v354, 4
        %v356 = vpop.permute.xlu0 %355
        %vm357 = vcmp.ge.s32.totalorder %v251, 4
        %v358 = vsel %vm357, %v356, 0.0
        %359 = vrot.lane.b32.xlu0 %v354, 2
        %v360 = vpop.permute.xlu0 %359
        %v361 = vsel %vm254, %v360, 0.0
        %s362 = scalar_lea.vmem %s2, 16
        %v363 = vld [vmem:[%s362] sm:$0xff]
        %v364 = vld [vmem:[%s362 + $0x8] sm:$0xff]
        %v366 = vsel %vm262, %v363, 0
        %v369 = vsel %vm262, %v364, 0
        %371 = vmatpush.msra.mxu0 0.0
        %372 = vmatpush.msra.mxu0 0.0
        %373 = vmatpush.msra.mxu0 0.0
        %374 = vmatpush.msra.mxu0 0.0
        %375 = vmatpush.msra.mxu0 0.0
        %376 = vmatpush.msra.mxu0 0.0
        %377 = vmatpush.msra.mxu0 0.0
        %378 = vmatpush.msra.mxu0 0.0
        %379 = vmatpush.msra.mxu0 0.0
        %380 = vmatpush.msra.mxu0 0.0
        %381 = vmatpush.msra.mxu0 0.0
        %382 = vmatpush.msra.mxu0 0.0
        %383 = vmatpush.msra.mxu0 %v249
        %384 = vmatpush.msra.mxu0 %v354
        %385 = vmatpush.msra.mxu0 %v361
        %386 = vmatpush.msra.mxu0 %v358
        %387 = vmatmul.f32.gmra.mxu0 %v366
        %v388 = vpop.f32.mrf.mxu0
        %v389 = vadd.f32 0.0, %v388
        %390 = vmatmul.f32.gmra.mxu0 %v369
        %v391 = vpop.f32.mrf.mxu0
        %v392 = vadd.f32 0.0, %v391
        %393 = vdwg.mxu0
        %v394 = vtanh.pop %v389
        %v395 = vxor.u32 %v392, 2147483648
        %v396 = vmul.f32 %v395, 1.442695
        %v397 = vpow.pop %v396
        %v398 = vadd.f32 %v397, 1.0
        %v399 = vrcp.pop %v398
        %v400 = vmul.f32 %v398, %v399
        %v401 = vsub.f32 1.0, %v400
        %v402 = vmul.f32 %v399, %v401
        %v403 = vadd.f32 %v399, %v402
        %vm404 = vweird.f32 %v398
        %vm405 = vweird.f32 %v399
        %vm406 = vmor %vm404, %vm405
        %v407 = vsel %vm406, %v399, %v403
        %v408 = vand.u32 2147483647, %v398
        %vm409 = vcmp.eq.f32.partialorder %v408, 8.507059e+37
        %v410 = vand.u32 %v398, 2147483648
        %v411 = vor.u32 1.1754944e-38, %v410
        %v412 = vsel %vm409, %v411, %v407
        %v413 = vmul.f32 1.0, %v412
        %v414 = vmul.f32 %v394, %v413
        %s415 = scalar_lea.vmem %s3, 24
        %v416 = vld [vmem:[%s415] sm:$0xff]
        %v417 = vld [vmem:[%s415 + $0x8] sm:$0xff]
        %v418 = vld [vmem:[%s415 + $0x10] sm:$0xff]
        %v420 = vsel %vm316, %v416, 0
        %v423 = vsel %vm316, %v417, 0
        %v426 = vsel %vm316, %v418, 0
        %428 = vmatpush.msra.mxu0 0.0
        %429 = vmatpush.msra.mxu0 0.0
        %430 = vmatpush.msra.mxu0 0.0
        %431 = vmatpush.msra.mxu0 0.0
        %432 = vmatpush.msra.mxu0 0.0
        %433 = vmatpush.msra.mxu0 0.0
        %434 = vmatpush.msra.mxu0 0.0
        %435 = vmatpush.msra.mxu0 0.0
        %436 = vmatpush.msra.mxu0 0.0
        %437 = vmatpush.msra.mxu0 0.0
        %438 = vmatpush.msra.mxu0 0.0
        %439 = vmatpush.msra.mxu0 0.0
        %440 = vmatpush.msra.mxu0 0.0
        %441 = vmatpush.msra.mxu0 0.0
        %442 = vmatpush.msra.mxu0 %v249
        %443 = vmatpush.msra.mxu0 %v414
        %444 = vmatmul.f32.gmra.mxu0 %v420
        %v445 = vpop.f32.mrf.mxu0
        %v446 = vadd.f32 0.0, %v445
        %447 = vmatmul.f32.gmra.mxu0 %v423
        %v448 = vpop.f32.mrf.mxu0
        %v449 = vadd.f32 0.0, %v448
        %450 = vmatmul.f32.gmra.mxu0 %v426
        %v451 = vpop.f32.mrf.mxu0
        %v452 = vadd.f32 0.0, %v451
        %453 = vdwg.mxu0
        %s454 = scalar_lea.vmem %s239, 16 [#allocation4]
        %455 = vst [vmem:[%s454] sm:$0xff] %v446
        %456 = vst [vmem:[%s454 + $0x8] sm:$0xff] %v449
        %v457 = vadd.f32 %v452, %v354
        %458 = vrot.lane.b32.xlu0 %v457, 8
        %v459 = vpop.permute.xlu0 %458
        %vm460 = vcmp.ge.s32.totalorder %v251, 8
        %v461 = vsel %vm460, %v459, 0.0
        %462 = vrot.lane.b32.xlu0 %v457, 4
        %v463 = vpop.permute.xlu0 %462
        %v464 = vsel %vm357, %v463, 0.0
        %s465 = scalar_lea.vmem %s2, 32
        %v466 = vld [vmem:[%s465] sm:$0xff]
        %v467 = vld [vmem:[%s465 + $0x8] sm:$0xff]
        %v469 = vsel %vm262, %v466, 0
        %v472 = vsel %vm262, %v467, 0
        %474 = vmatpush.msra.mxu0 0.0
        %475 = vmatpush.msra.mxu0 0.0
        %476 = vmatpush.msra.mxu0 0.0
        %477 = vmatpush.msra.mxu0 0.0
        %478 = vmatpush.msra.mxu0 0.0
        %479 = vmatpush.msra.mxu0 0.0
        %480 = vmatpush.msra.mxu0 0.0
        %481 = vmatpush.msra.mxu0 0.0
        %482 = vmatpush.msra.mxu0 0.0
        %483 = vmatpush.msra.mxu0 0.0
        %484 = vmatpush.msra.mxu0 0.0
        %485 = vmatpush.msra.mxu0 0.0
        %486 = vmatpush.msra.mxu0 %v249
        %487 = vmatpush.msra.mxu0 %v457
        %488 = vmatpush.msra.mxu0 %v464
        %489 = vmatpush.msra.mxu0 %v461
        %490 = vmatmul.f32.gmra.mxu0 %v469
        %v491 = vpop.f32.mrf.mxu0
        %v492 = vadd.f32 0.0, %v491
        %493 = vmatmul.f32.gmra.mxu0 %v472
        %v494 = vpop.f32.mrf.mxu0
        %v495 = vadd.f32 0.0, %v494
        %496 = vdwg.mxu0
        %v497 = vtanh.pop %v492
        %v498 = vxor.u32 %v495, 2147483648
        %v499 = vmul.f32 %v498, 1.442695
        %v500 = vpow.pop %v499
        %v501 = vadd.f32 %v500, 1.0
        %v502 = vrcp.pop %v501
        %v503 = vmul.f32 %v501, %v502
        %v504 = vsub.f32 1.0, %v503
        %v505 = vmul.f32 %v502, %v504
        %v506 = vadd.f32 %v502, %v505
        %vm507 = vweird.f32 %v501
        %vm508 = vweird.f32 %v502
        %vm509 = vmor %vm507, %vm508
        %v510 = vsel %vm509, %v502, %v506
        %v511 = vand.u32 2147483647, %v501
        %vm512 = vcmp.eq.f32.partialorder %v511, 8.507059e+37
        %v513 = vand.u32 %v501, 2147483648
        %v514 = vor.u32 1.1754944e-38, %v513
        %v515 = vsel %vm512, %v514, %v510
        %v516 = vmul.f32 1.0, %v515
        %v517 = vmul.f32 %v497, %v516
        %s518 = scalar_lea.vmem %s3, 48
        %v519 = vld [vmem:[%s518] sm:$0xff]
        %v520 = vld [vmem:[%s518 + $0x8] sm:$0xff]
        %v521 = vld [vmem:[%s518 + $0x10] sm:$0xff]
        %v523 = vsel %vm316, %v519, 0
        %v526 = vsel %vm316, %v520, 0
        %v529 = vsel %vm316, %v521, 0
        %531 = vmatpush.msra.mxu0 0.0
        %532 = vmatpush.msra.mxu0 0.0
        %533 = vmatpush.msra.mxu0 0.0
        %534 = vmatpush.msra.mxu0 0.0
        %535 = vmatpush.msra.mxu0 0.0
        %536 = vmatpush.msra.mxu0 0.0
        %537 = vmatpush.msra.mxu0 0.0
        %538 = vmatpush.msra.mxu0 0.0
        %539 = vmatpush.msra.mxu0 0.0
        %540 = vmatpush.msra.mxu0 0.0
        %541 = vmatpush.msra.mxu0 0.0
        %542 = vmatpush.msra.mxu0 0.0
        %543 = vmatpush.msra.mxu0 0.0
        %544 = vmatpush.msra.mxu0 0.0
        %545 = vmatpush.msra.mxu0 %v249
        %546 = vmatpush.msra.mxu0 %v517
        %547 = vmatmul.f32.gmra.mxu0 %v523
        %v548 = vpop.f32.mrf.mxu0
        %v549 = vadd.f32 0.0, %v548
        %550 = vmatmul.f32.gmra.mxu0 %v526
        %v551 = vpop.f32.mrf.mxu0
        %v552 = vadd.f32 0.0, %v551
        %553 = vmatmul.f32.gmra.mxu0 %v529
        %v554 = vpop.f32.mrf.mxu0
        %555 = vdwg.mxu0
        %s556 = scalar_lea.vmem %s239, 32 [#allocation4]
        %557 = vst [vmem:[%s556] sm:$0xff] %v549
        %558 = vst [vmem:[%s556 + $0x8] sm:$0xff] %v552
        %v559 = vadd.f32 %v517, %v457
        %560 = vst [vmem:[%s232] sm:$0xff] %v559
        %s561 = sand.u32 %s125, 1
        %s562 = scalar_lea.sflag [#allocation3], %s561
        %s563 = sand.u32 %s125, 1
        %s564 = smul.addr %s563, 8
        %s565 = scalar_lea.vmem [#allocation2], %s564
        %s566 = sand.u32 %s151, 1
        %s567 = scalar_lea.sflag [#allocation5], %s566
        %s568 = sand.u32 %s151, 1
        %s569 = smul.addr %s568, 48
        %s570 = scalar_lea.vmem [#allocation4], %s569
        // Predicated region
        $region37: #{tpu_custom_call.1} parent=35 // pred_check
          %p571 = pneg %p135
        $region38: #{tpu_custom_call.1} parent=35 // pred_check_branch
          %573 = sbr.rel (%p571) target = $region40
        $region39: #{tpu_custom_call.1} parent=35 // pred_region
          %575 = vsyncadd %s562, 0
          %s576 = smul.addr %s23, 8
          %s577 = scalar_lea.hbm %s4, %s576
          %s579 = sshll.u32 %s565, 4
          %s580 = int_to_ptr.vmem [resolvable:$true] %s579
          %s581 = sshll.u32 %s577, 4
          %s582 = int_to_ptr.hbm [resolvable:$true] %s581
          %584 = dma.vmem_to_hbm [thread:$0]  %s580, 128, %s582, %s562
        $region40: #{tpu_custom_call.1} parent=35 // pred_fallthru
          _
        // Predicated region
        $region41: #{tpu_custom_call.1} parent=35 // pred_check
          %p585 = pneg %p161
        $region42: #{tpu_custom_call.1} parent=35 // pred_check_branch
          %587 = sbr.rel (%p585) target = $region44
        $region43: #{tpu_custom_call.1} parent=35 // pred_region
          %589 = vsyncadd %s567, 0
          %s590 = smul.addr %s23, 6
          %s591 = smul.addr %s590, 8
          %s592 = scalar_lea.hbm %s5, %s591
          %s593 = sshll.u32 %s570, 4
          %s594 = int_to_ptr.vmem [resolvable:$true] %s593
          %s595 = sshll.u32 %s592, 4
          %s596 = int_to_ptr.hbm [resolvable:$true] %s595
          %601 = dma.vmem_to_hbm [thread:$0]  %s594, 768, %s596, %s567, 128, 128, 8
        $region44: #{tpu_custom_call.1} parent=35 // pred_fallthru
          _
      $region36: #{tpu_custom_call.1} parent=5 // pred_fallthru
        _
      %p602 = scmp.le.s32.totalorder 2, %s18
      // Predicated region
      $region45: #{tpu_custom_call.1} parent=5 // pred_check
        %p603 = pneg %p602
      $region46: #{tpu_custom_call.1} parent=5 // pred_check_branch
        %605 = sbr.rel (%p603) target = $region48
      $region47: #{tpu_custom_call.1} parent=5 // pred_region
        %s606 = ssub.s32 %s18, 2
        // Predicated region
        $region49: #{tpu_custom_call.1} parent=47 // pred_check
          %p607 = pneg %p141
        $region50: #{tpu_custom_call.1} parent=47 // pred_check_branch
          %609 = sbr.rel (%p607) target = $region52
        $region51: #{tpu_custom_call.1} parent=47 // pred_region
          %s610 = sand.u32 %s126, 1
          %s611 = scalar_lea.sflag [#allocation3], %s610
          %s612 = sand.u32 %s126, 1
          %s613 = smul.addr %s612, 8
          %s614 = scalar_lea.vmem [#allocation2], %s613
          %616 = dma.done %s611, 128
        $region52: #{tpu_custom_call.1} parent=47 // pred_fallthru
          _
        // Predicated region
        $region53: #{tpu_custom_call.1} parent=47 // pred_check
          %p617 = pneg %p167
        $region54: #{tpu_custom_call.1} parent=47 // pred_check_branch
          %619 = sbr.rel (%p617) target = $region56
        $region55: #{tpu_custom_call.1} parent=47 // pred_region
          %s620 = sand.u32 %s152, 1
          %s621 = scalar_lea.sflag [#allocation5], %s620
          %s622 = sand.u32 %s152, 1
          %s623 = smul.addr %s622, 48
          %s624 = scalar_lea.vmem [#allocation4], %s623
          %626 = dma.done %s621, 768
        $region56: #{tpu_custom_call.1} parent=47 // pred_fallthru
          _
      $region48: #{tpu_custom_call.1} parent=5 // pred_fallthru
        _
    $region6: #{tpu_custom_call.1} parent=1 // loop_footer
      %s22 = sadd.s32 1, %s18
    $region7: #{tpu_custom_call.1} parent=1 // loop_footer_branch
      %17 = sbr.rel target = $region3
    $region8: #{tpu_custom_call.1} parent=1 // loop_exit
      _
    %627 = vsyncpa [#allocation3], 1
    %s628 = scalar_lea.sflag [#allocation3], 1
    %629 = vsyncpa %s628, 1
    %630 = vsyncpa [#allocation5], 1
    %s631 = scalar_lea.sflag [#allocation5], 1
    %632 = vsyncpa %s631, 1

</llo_original>
